<compile_context>
chip_gen: v6e
topology: v6e:2x2x1
jax: 0.10.0
libtpu: 0.0.40
codegen_flags: <defaults>
</compile_context>

<pallas_src>
import jax
import jax.numpy as jnp
from jax.experimental import pallas as pl
from jax.experimental.pallas import tpu as pltpu


_LANE_COLS = 1024        # lane-dense width: large multiple of 128
_MAX_BLOCK_ROWS = 512    # (512, 1024) f32 block = 2 MiB; 4x (in+out, double-buffered) = 8 MiB


def _exp_envelope_kernel(d_ref, o_ref):
    # Upcast to f32: keeps numerics aligned with the f32 reference and avoids
    # bf16 transcendental emulation on v5e (no bf16 VPU/EUP there).
    d = d_ref[...].astype(jnp.float32)
    in_range = d < 1.0
    # Safe denominator: avoids 0/0 at d == 1. The forward output is identical
    # (masked by the where below) and any future autodiff stays NaN-free.
    d_safe = jnp.where(in_range, d, 0.5)
    denom = (1.0 - d_safe) * (1.0 + d_safe)
    # Exact f32 divide on purpose: the kernel is DMA/HBM bound, so the VALU cost
    # of the divide is fully hidden; pl.reciprocal(approx=True) would only trade
    # accuracy (vs. the exact reference) for zero wall-clock gain here.
    env = jnp.exp(-(d_safe * d_safe) / denom)
    o_ref[...] = jnp.where(in_range, env, 0.0).astype(o_ref.dtype)


def _choose_block_rows(rows: int) -> int:
    """Pick a row-block size: big lane-dense tiles, but keep >= ~4 grid steps
    when possible so v7x's two TensorCores are both used."""
    if rows <= 16:
        # Single block equal to the full row extent (block == full dim, so the
        # (8,128)/(16,128) divisibility constraint does not apply).
        return rows
    target = rows // 4
    # Multiple of 16: satisfies the sublane constraint for both f32 (8) and bf16 (16).
    target = (target // 16) * 16
    return max(16, min(_MAX_BLOCK_ROWS, target))


def exponential_envelope(d_scaled: jax.Array) -> jax.Array:
    """Applies the SpookyNet exponential envelope elementwise via a Pallas TPU kernel."""
    orig_shape = d_scaled.shape
    orig_dtype = d_scaled.dtype
    n = d_scaled.size
    if n == 0:
        return d_scaled

    flat = d_scaled.reshape(-1)

    cols = _LANE_COLS
    rows = -(-n // cols)
    padded = rows * cols
    if padded != n:
        # Pad only when misaligned. Pad value 2.0 (>= 1) maps to 0 and is sliced
        # off afterwards; lane-aligned inputs take the zero-copy path.
        flat = jnp.concatenate(
            [flat, jnp.full((padded - n,), 2.0, dtype=orig_dtype)]
        )
    d2 = flat.reshape(rows, cols)

    block_rows = _choose_block_rows(rows)
    grid = (pl.cdiv(rows, block_rows),)

    out = pl.pallas_call(
        _exp_envelope_kernel,
        out_shape=jax.ShapeDtypeStruct((rows, cols), orig_dtype),
        grid=grid,
        in_specs=[pl.BlockSpec((block_rows, cols), lambda i: (i, 0))],
        out_specs=pl.BlockSpec((block_rows, cols), lambda i: (i, 0)),
        compiler_params=pltpu.CompilerParams(
            dimension_semantics=("parallel",),
        ),
    )(d2)

    flat_out = out.reshape(-1)
    if padded != n:
        flat_out = flat_out[:n]
    return flat_out.reshape(orig_shape)


def _reference(d_scaled: jax.Array) -> jax.Array:
    env = jnp.exp(-(d_scaled ** 2) / ((1.0 - d_scaled) * (1.0 + d_scaled)))
    return jnp.where(d_scaled < 1.0, env, jnp.zeros_like(d_scaled))


if __name__ == "__main__":
    key = jax.random.PRNGKey(0)
    k1, k2, k3 = jax.random.split(key, 3)

    # Scaled interatomic distances ~ U[0, 1.2) so the d >= 1 cutoff branch is exercised.
    tests = [
        # (num_edges,) tiny / lane-misaligned -> single small block + pad/slice path
        jax.random.uniform(k1, (512,), jnp.float32, minval=0.0, maxval=1.2),
        # lane-aligned 2-D -> zero-copy, multi-step tiled path (rows=64, 4 grid steps)
        jax.random.uniform(k2, (64, 1024), jnp.float32, minval=0.0, maxval=1.2),
        # misaligned 2-D shape
        jax.random.uniform(k3, (3, 777), jnp.float32, minval=0.0, maxval=1.2),
        # edge values incl. exactly 1.0 (0/0 in the naive denominator)
        jnp.array([0.0, 0.5, 0.999999, 1.0, 1.0000001, 1.5], dtype=jnp.float32),
    ]

    for d in tests:
        out = jax.block_until_ready(exponential_envelope(d))
        ref = _reference(d)
        assert out.shape == d.shape and out.dtype == d.dtype
        assert jnp.allclose(out, ref, atol=1e-6, rtol=1e-6), "mismatch vs reference"

    print("KERNEL_OK")
</pallas_src>

<mosaic_0001>
module attributes {stable_mosaic.version = 11 : i64} {
  func.func @_exp_envelope_kernel(%arg0: i32, %arg1: memref<1x1024xf32, #tpu.memory_space<vmem>>, %arg2: memref<1x1024xf32, #tpu.memory_space<vmem>>) attributes {dimension_semantics = [#tpu.dimension_semantics<parallel>], iteration_bounds = array<i64: 1>, scalar_prefetch = 0 : i64, scratch_operands = 0 : i64, tpu.core_type = #tpu.core_type<tc>, window_params = [{transform_indices = @transform_0, window_bounds = array<i64: 1, 1024>}, {transform_indices = @transform_1, window_bounds = array<i64: 1, 1024>}]} {
    %c0 = arith.constant 0 : index
    %c0_0 = arith.constant 0 : index
    %0 = vector.load %arg1[%c0, %c0_0] : memref<1x1024xf32, #tpu.memory_space<vmem>>, vector<1x1024xf32>
    %cst = arith.constant 1.000000e+00 : f32
    %1 = vector.broadcast %cst : f32 to vector<1x1024xf32>
    %2 = arith.cmpf olt, %0, %1 : vector<1x1024xf32>
    %cst_1 = arith.constant 5.000000e-01 : f32
    %3 = vector.broadcast %cst_1 : f32 to vector<1x1024xf32>
    %4 = arith.select %2, %0, %3 : vector<1x1024xi1>, vector<1x1024xf32>
    %cst_2 = arith.constant 1.000000e+00 : f32
    %5 = vector.broadcast %cst_2 : f32 to vector<1x1024xf32>
    %6 = arith.subf %5, %4 : vector<1x1024xf32>
    %cst_3 = arith.constant 1.000000e+00 : f32
    %7 = vector.broadcast %cst_3 : f32 to vector<1x1024xf32>
    %8 = arith.addf %7, %4 : vector<1x1024xf32>
    %9 = arith.mulf %6, %8 : vector<1x1024xf32>
    %10 = arith.mulf %4, %4 : vector<1x1024xf32>
    %cst_4 = arith.constant 0.000000e+00 : f32
    %11 = vector.broadcast %cst_4 : f32 to vector<1x1024xf32>
    %12 = arith.subf %11, %10 : vector<1x1024xf32>
    %13 = arith.divf %12, %9 : vector<1x1024xf32>
    %14 = math.exp %13 : vector<1x1024xf32>
    %cst_5 = arith.constant 0.000000e+00 : f32
    %15 = vector.broadcast %cst_5 : f32 to vector<1x1024xf32>
    %16 = arith.select %2, %14, %15 : vector<1x1024xi1>, vector<1x1024xf32>
    %c0_6 = arith.constant 0 : index
    %c0_7 = arith.constant 0 : index
    %17 = vector.load %arg2[%c0_6, %c0_7] : memref<1x1024xf32, #tpu.memory_space<vmem>>, vector<1x1024xf32>
    tpu.vector_store %arg2[%c0_6, %c0_7], %16 {strides = array<i32>} : memref<1x1024xf32, #tpu.memory_space<vmem>>, vector<1x1024xf32>,
    return
  }
  func.func @transform_0(%arg0: i32) -> (i32, i32) {
    %c0_i32 = arith.constant 0 : i32
    %c0_i32_0 = arith.constant 0 : i32
    return %arg0, %c0_i32 : i32, i32
  }
  func.func @transform_1(%arg0: i32) -> (i32, i32) {
    %c0_i32 = arith.constant 0 : i32
    %c0_i32_0 = arith.constant 0 : i32
    return %arg0, %c0_i32 : i32, i32
  }
}

</mosaic_0001>

<llo_original>
// kernel: tpu_custom_call.1
$region0: #{tpu_custom_call.1}
  #allocation0 [shape = 'u32[]', space=smem, size = 0x4, offset = 0x4, fixed_abs, tag = 'smem constant byte address 0x4 - core index']
  #allocation1 [shape = 'u32[144,128]{1,0:T(1,128)}', space=vmem, size = 0x12000, scoped, tag = 'internal scratch']
  %s0 = inlined_call_operand.hbm [shape: f32[1,1024], index: 0, kind: input, shape index: {}]
  %s1 = inlined_call_operand.hbm [shape: f32[1,1024], index: 1, kind: output, shape index: {}]
  %s2 = sld [smem:[#allocation0]]
  $region18: #{tpu_custom_call.1} parent=0
    _
  %s4 = ssub.s32 1, %s2
  %s5 = scalar_select 0, %s4, %s2
  $region1: #{tpu_custom_call.1} parent=0
    #allocation2 [shape = 'u8[4096]{0}', space=vmem, size = 0x1000, scoped, tag = 'input window, operand 0, single buffered']
    #allocation3 [shape = 's32[1]{0}', space=sflag, size = 0x4, scoped, tag = 'scoped memory for tpu_custom_call.1']
    #allocation4 [shape = 's32[1]{0}', space=sflag, size = 0x4, scoped, tag = 'scoped memory for tpu_custom_call.1']
    #allocation5 [shape = 'u8[4096]{0}', space=vmem, size = 0x1000, scoped, tag = 'output window, operand 0, single buffered']
    %6 = vsyncpa [#allocation3], 0
    %7 = vsyncpa [#allocation4], 0
    // Predicated region
    $region2: #{tpu_custom_call.1} parent=1 // pred_check
      _
    $region3: #{tpu_custom_call.1} parent=1 // pred_check_branch
      %9 = sbr.rel (0) target = $region5
    $region4: #{tpu_custom_call.1} parent=1 // pred_region
      %s11 = ssub.s32 128, 128
      %12 = vsyncadd [#allocation3], %s11
      %s14 = sshll.u32 [#allocation2], 4
      %s15 = int_to_ptr.vmem [resolvable:$true] %s14
      %17 = dma.hbm_to_vmem [thread:$0]  %s0, 128, %s15, [#allocation3]
    $region5: #{tpu_custom_call.1} parent=1 // pred_fallthru
      _
    // Predicated region
    $region6: #{tpu_custom_call.1} parent=1 // pred_check
      _
    $region7: #{tpu_custom_call.1} parent=1 // pred_check_branch
      %19 = sbr.rel (0) target = $region9
    $region8: #{tpu_custom_call.1} parent=1 // pred_region
      %20 = dma.done [#allocation3], 128
    $region9: #{tpu_custom_call.1} parent=1 // pred_fallthru
      _
    %v21 = vld [vmem:[#allocation2] sm:$0xff]
    %vm22 = vcmp.lt.f32.partialorder %v21, 1.0
    %v23 = vsel %vm22, %v21, 0.5
    %v24 = vsub.f32 1.0, %v23
    %v25 = vadd.f32 %v23, 1.0
    %v26 = vmul.f32 %v24, %v25
    %v27 = vmul.f32 %v23, %v23
    %v28 = vsub.f32 0.0, %v27
    %v29 = vrcp.pop %v26
    %v30 = vmul.f32 %v28, %v29
    %v31 = vmul.f32 %v30, 1.442695
    %v32 = vpow.pop %v31
    %v33 = vsel %vm22, %v32, 0.0
    %34 = vst [vmem:[#allocation5] sm:$0xff] %v33
    // Predicated region
    $region10: #{tpu_custom_call.1} parent=1 // pred_check
      _
    $region11: #{tpu_custom_call.1} parent=1 // pred_check_branch
      %36 = sbr.rel (0) target = $region13
    $region12: #{tpu_custom_call.1} parent=1 // pred_region
      %s38 = ssub.s32 128, 128
      %39 = vsyncadd [#allocation4], %s38
      %s41 = sshll.u32 [#allocation5], 4
      %s42 = int_to_ptr.vmem [resolvable:$true] %s41
      %44 = dma.vmem_to_hbm [thread:$0]  %s42, 128, %s1, [#allocation4]
    $region13: #{tpu_custom_call.1} parent=1 // pred_fallthru
      _
    // Predicated region
    $region14: #{tpu_custom_call.1} parent=1 // pred_check
      _
    $region15: #{tpu_custom_call.1} parent=1 // pred_check_branch
      %46 = sbr.rel (0) target = $region17
    $region16: #{tpu_custom_call.1} parent=1 // pred_region
      %47 = dma.done [#allocation4], 128
    $region17: #{tpu_custom_call.1} parent=1 // pred_fallthru
      _
    %48 = vsyncpa [#allocation3], 1
    %49 = vsyncpa [#allocation4], 1

</llo_original>
